<compile_context>
chip_gen: v6e
topology: v6e:2x2x1
jax: 0.10.0
libtpu: 0.0.40
codegen_flags: <defaults>
</compile_context>

<pallas_src>
import functools
import math

import jax
import jax.numpy as jnp
from jax.experimental import pallas as pl
from jax.experimental.pallas import tpu as pltpu


# ----------------------------------------------------------------------------
# Fused kernel: (avg_pool + linear) matmul + row softmax + dropout, one shot.
# ----------------------------------------------------------------------------
def cam_fused_kernel(x_ref, wexp_ref, b_ref, bits_ref, out_ref, probs_ref,
                     *, threshold, scale):
    # x_ref:     (B, C*HW) f32   lane-dense input
    # wexp_ref:  (C*HW, NC) f32  avg-pool folded into the weight
    # b_ref:     (1, NC)   f32
    # bits_ref:  (B, C*HW) u32   raw random bits for the dropout mask
    x = x_ref[...]

    # gap @ W^T + b  ==  x2d @ W_exp + b   (single MXU matmul, K = C*HW)
    logits = jnp.dot(x, wexp_ref[...],
                     preferred_element_type=jnp.float32) + b_ref[...]      # (B, NC)
    m = jnp.max(logits, axis=-1, keepdims=True)
    e = jnp.exp(logits - m)
    probs_ref[...] = e / jnp.sum(e, axis=-1, keepdims=True)                # softmax(dim=1)

    # dropout: keep iff bits >= round(p * 2^32)  (P(keep) = 1 - p), scale kept by 1/(1-p)
    keep = bits_ref[...] >= jnp.uint32(threshold)
    out_ref[...] = jnp.where(keep, x * jnp.float32(scale),
                             jnp.zeros_like(x)).astype(out_ref.dtype)


# ----------------------------------------------------------------------------
# Wrapper
# ----------------------------------------------------------------------------
def cam_block_dropout(x_nchw, weight, bias, *, drop_rate, is_imagenet, rng_key):
    B, C, H, W = x_nchw.shape
    pool = 8 if is_imagenet else 4
    # gap.view(B, -1) must equal (B, planes) for the nn.Linear to apply
    assert H == pool and W == pool, "spatial size must equal the pool size (as in the module)"
    num_classes = weight.shape[0]
    HW = H * W
    CHW = C * HW

    # Lane-dense layout: (B, C*HW) so the last dim is a large multiple of 128.
    x2d = x_nchw.reshape(B, CHW)

    # Fold the average pool into the linear weight:
    #   logits[b, n] = sum_{c,hw} x[b, c, hw] * weight[n, c] / HW + bias[n]
    w_exp = jnp.repeat(weight.astype(jnp.float32) / HW, HW, axis=1).T      # (C*HW, NC)
    b2d = bias.reshape(1, num_classes).astype(jnp.float32)

    # Static dropout parameters (guard p == 0 and p == 1, matching F.dropout).
    p = float(drop_rate)
    if p <= 0.0:
        threshold, scale = 0, 1.0                      # keep everything, no scaling
    elif p >= 1.0:
        threshold, scale = 0, 0.0                      # keep "everything" but zero it out
    else:
        threshold = min(int(round(p * (1 << 32))), (1 << 32) - 1)
        scale = 1.0 / (1.0 - p)

    # Random bits generated with jax.random (portable: works on TPU and in interpret
    # mode; pltpu.prng_seed has no CPU/interpret lowering).
    bits = jax.random.bits(rng_key, (B, CHW), dtype=jnp.uint32)

    vmem = pl.BlockSpec(memory_space=pltpu.MemorySpace.VMEM)
    out2d, probs = pl.pallas_call(
        functools.partial(cam_fused_kernel, threshold=threshold, scale=scale),
        out_shape=(jax.ShapeDtypeStruct((B, CHW), x2d.dtype),
                   jax.ShapeDtypeStruct((B, num_classes), jnp.float32)),
        in_specs=[vmem, vmem, vmem, vmem],
        out_specs=(vmem, vmem),
    )(x2d, w_exp, b2d, bits)

    # _discriminative_idx: sort class-0 prob over the batch (descending).  cam_idx is a
    # full permutation of batch rows, so `x[cam_idx] = dropout(x[cam_idx])` == dropout
    # on every row; the output tensor does not depend on it.
    # TODO(synk): torch.sort has no Pallas primitive; the tiny (B,) argsort stays as JAX glue.
    cam_idx = jnp.argsort(-probs[:, 0]).astype(jnp.int32)

    return out2d.reshape(B, C, H, W), cam_idx


# ----------------------------------------------------------------------------
# Demo
# ----------------------------------------------------------------------------
if __name__ == "__main__":
    B, planes, num_classes = 8, 32, 10
    H = W = 4                      # is_imagenet=False -> avg_pool2d(x, 4)
    drop_rate = 0.5

    key = jax.random.PRNGKey(0)
    kx, kw, kb, kd = jax.random.split(key, 4)

    x = jax.random.normal(kx, (B, planes, H, W), dtype=jnp.float32)

    # nn.Linear(planes, num_classes) init: U(-1/sqrt(planes), 1/sqrt(planes))
    bound = 1.0 / math.sqrt(planes)
    weight = jax.random.uniform(kw, (num_classes, planes), jnp.float32, -bound, bound)
    bias = jax.random.uniform(kb, (num_classes,), jnp.float32, -bound, bound)

    out, cam_idx = cam_block_dropout(x, weight, bias, drop_rate=drop_rate,
                                     is_imagenet=False, rng_key=kd)
    out = jax.block_until_ready(out)

    assert out.shape == x.shape and out.dtype == x.dtype
    assert cam_idx.shape == (B,)
    print("KERNEL_OK")
</pallas_src>

<mosaic_0001>
module attributes {stable_mosaic.version = 11 : i64} {
  func.func @cam_fused_kernel(%arg0: memref<8x512xf32, #tpu.memory_space<vmem>>, %arg1: memref<512x10xf32, #tpu.memory_space<vmem>>, %arg2: memref<1x10xf32, #tpu.memory_space<vmem>>, %arg3: memref<8x512xi32, #tpu.memory_space<vmem>>, %arg4: memref<8x512xf32, #tpu.memory_space<vmem>>, %arg5: memref<8x10xf32, #tpu.memory_space<vmem>>) attributes {dimension_semantics = [], scalar_prefetch = 0 : i64, scratch_operands = 0 : i64, tpu.core_type = #tpu.core_type<tc>} {
    %c0 = arith.constant 0 : index
    %c0_0 = arith.constant 0 : index
    %0 = vector.load %arg0[%c0, %c0_0] : memref<8x512xf32, #tpu.memory_space<vmem>>, vector<8x512xf32>
    %c0_1 = arith.constant 0 : index
    %c0_2 = arith.constant 0 : index
    %1 = vector.load %arg1[%c0_1, %c0_2] : memref<512x10xf32, #tpu.memory_space<vmem>>, vector<512x10xf32>
    %cst = arith.constant dense<0.000000e+00> : vector<8x10xf32>
    %2 = tpu.matmul %0, %1, %cst {dimension_numbers = #tpu.dot_dimension_numbers<[1], [0], [0], [1], [0, 0, 1, 1], [], []>} : vector<8x512xf32>, vector<512x10xf32>, vector<8x10xf32> -> vector<8x10xf32>
    %c0_3 = arith.constant 0 : index
    %c0_4 = arith.constant 0 : index
    %3 = vector.load %arg2[%c0_3, %c0_4] : memref<1x10xf32, #tpu.memory_space<vmem>>, vector<1x10xf32>
    %4 = vector.broadcast %3 : vector<1x10xf32> to vector<8x10xf32>
    %5 = arith.addf %2, %4 : vector<8x10xf32>
    %cst_5 = arith.constant dense<0xFF800000> : vector<8xf32>
    %6 = vector.multi_reduction <maximumf>, %5, %cst_5 [1] : vector<8x10xf32> to vector<8xf32>
    %7 = vector.shape_cast %6 : vector<8xf32> to vector<8x1xf32>
    %8 = vector.broadcast %7 : vector<8x1xf32> to vector<8x10xf32>
    %9 = arith.subf %5, %8 : vector<8x10xf32>
    %10 = math.exp %9 : vector<8x10xf32>
    %cst_6 = arith.constant dense<0.000000e+00> : vector<8xf32>
    %11 = vector.multi_reduction <add>, %10, %cst_6 [1] : vector<8x10xf32> to vector<8xf32>
    %12 = vector.shape_cast %11 : vector<8xf32> to vector<8x1xf32>
    %13 = vector.broadcast %12 : vector<8x1xf32> to vector<8x10xf32>
    %14 = arith.divf %10, %13 : vector<8x10xf32>
    %c0_7 = arith.constant 0 : index
    %c0_8 = arith.constant 0 : index
    %15 = vector.load %arg5[%c0_7, %c0_8] : memref<8x10xf32, #tpu.memory_space<vmem>>, vector<8x10xf32>
    tpu.vector_store %arg5[%c0_7, %c0_8], %14 {strides = array<i32>} : memref<8x10xf32, #tpu.memory_space<vmem>>, vector<8x10xf32>,
    %c0_9 = arith.constant 0 : index
    %c0_10 = arith.constant 0 : index
    %16 = vector.load %arg3[%c0_9, %c0_10] : memref<8x512xi32, #tpu.memory_space<vmem>>, vector<8x512xi32>
    %c-2147483648_i32 = arith.constant -2147483648 : i32
    %17 = vector.broadcast %c-2147483648_i32 : i32 to vector<8x512xi32>
    %18 = arith.cmpi uge, %16, %17 : vector<8x512xi32>
    %cst_11 = arith.constant 2.000000e+00 : f32
    %19 = vector.broadcast %cst_11 : f32 to vector<8x512xf32>
    %20 = arith.mulf %0, %19 : vector<8x512xf32>
    %cst_12 = arith.constant 0.000000e+00 : f32
    %21 = vector.broadcast %cst_12 : f32 to vector<8x512xf32>
    %22 = arith.select %18, %20, %21 : vector<8x512xi1>, vector<8x512xf32>
    %c0_13 = arith.constant 0 : index
    %c0_14 = arith.constant 0 : index
    %23 = vector.load %arg4[%c0_13, %c0_14] : memref<8x512xf32, #tpu.memory_space<vmem>>, vector<8x512xf32>
    tpu.vector_store %arg4[%c0_13, %c0_14], %22 {strides = array<i32>} : memref<8x512xf32, #tpu.memory_space<vmem>>, vector<8x512xf32>,
    return
  }
}

</mosaic_0001>

<llo_original>
// kernel: tpu_custom_call.1
$region0: #{tpu_custom_call.1}
  #allocation0 [shape = 'u32[]', space=smem, size = 0x4, offset = 0x4, fixed_abs, tag = 'smem constant byte address 0x4 - core index']
  #allocation1 [shape = 'u32[144,128]{1,0:T(1,128)}', space=vmem, size = 0x12000, scoped, tag = 'internal scratch']
  %s0 = inlined_call_operand.vmem [shape: f32[8,512], index: 0, kind: input, shape index: {}]
  %s1 = inlined_call_operand.vmem [shape: f32[512,10], index: 1, kind: input, shape index: {}]
  %s2 = inlined_call_operand.vmem [shape: f32[1,10], index: 2, kind: input, shape index: {}]
  %s3 = inlined_call_operand.vmem [shape: u32[8,512], index: 3, kind: input, shape index: {}]
  %s4 = inlined_call_operand.hbm [shape: f32[8,512], index: 4, kind: output, shape index: {0}]
  %s5 = inlined_call_operand.hbm [shape: f32[8,10], index: 5, kind: output, shape index: {1}]
  %6 = xla_tuple %s4, %s5
  %s7 = sld [smem:[#allocation0]]
  $region34: #{tpu_custom_call.1} parent=0
    _
  %s9 = ssub.s32 1, %s7
  %s10 = scalar_select 0, %s9, %s7
  $region1: #{tpu_custom_call.1} parent=0
    #allocation2 [shape = 'u8[16384]{0}', space=vmem, size = 0x4000, scoped, tag = 'output window, operand 0, single buffered']
    #allocation3 [shape = 's32[1]{0}', space=sflag, size = 0x4, scoped, tag = 'scoped memory for tpu_custom_call.1']
    #allocation4 [shape = 'u8[4096]{0}', space=vmem, size = 0x1000, scoped, tag = 'output window, operand 1, single buffered']
    #allocation5 [shape = 's32[1]{0}', space=sflag, size = 0x4, scoped, tag = 'scoped memory for tpu_custom_call.1']
    %11 = vsyncpa [#allocation3], 0
    %12 = vsyncpa [#allocation5], 0
    // Predicated region
    $region2: #{tpu_custom_call.1} parent=1 // pred_check
      _
    $region3: #{tpu_custom_call.1} parent=1 // pred_check_branch
      %14 = sbr.rel (0) target = $region5
    $region4: #{tpu_custom_call.1} parent=1 // pred_region
      _
    $region5: #{tpu_custom_call.1} parent=1 // pred_fallthru
      _
    // Predicated region
    $region6: #{tpu_custom_call.1} parent=1 // pred_check
      _
    $region7: #{tpu_custom_call.1} parent=1 // pred_check_branch
      %16 = sbr.rel (0) target = $region9
    $region8: #{tpu_custom_call.1} parent=1 // pred_region
      _
    $region9: #{tpu_custom_call.1} parent=1 // pred_fallthru
      _
    // Predicated region
    $region10: #{tpu_custom_call.1} parent=1 // pred_check
      _
    $region11: #{tpu_custom_call.1} parent=1 // pred_check_branch
      %18 = sbr.rel (0) target = $region13
    $region12: #{tpu_custom_call.1} parent=1 // pred_region
      _
    $region13: #{tpu_custom_call.1} parent=1 // pred_fallthru
      _
    // Predicated region
    $region14: #{tpu_custom_call.1} parent=1 // pred_check
      _
    $region15: #{tpu_custom_call.1} parent=1 // pred_check_branch
      %20 = sbr.rel (0) target = $region17
    $region16: #{tpu_custom_call.1} parent=1 // pred_region
      _
    $region17: #{tpu_custom_call.1} parent=1 // pred_fallthru
      _
    %v21 = vld [vmem:[%s0] sm:$0xff]
    %v22 = vld [vmem:[%s0 + $0x8] sm:$0xff]
    %v23 = vld [vmem:[%s0 + $0x10] sm:$0xff]
    %v24 = vld [vmem:[%s0 + $0x18] sm:$0xff]
    %v25 = vld [vmem:[%s1] sm:$0xff]
    %v26 = vld [vmem:[%s1 + $0x8] sm:$0xff]
    %v27 = vld [vmem:[%s1 + $0x10] sm:$0xff]
    %v28 = vld [vmem:[%s1 + $0x18] sm:$0xff]
    %v29 = vld [vmem:[%s1 + $0x20] sm:$0xff]
    %v30 = vld [vmem:[%s1 + $0x28] sm:$0xff]
    %v31 = vld [vmem:[%s1 + $0x30] sm:$0xff]
    %v32 = vld [vmem:[%s1 + $0x38] sm:$0xff]
    %v33 = vld [vmem:[%s1 + $0x40] sm:$0xff]
    %v34 = vld [vmem:[%s1 + $0x48] sm:$0xff]
    %v35 = vld [vmem:[%s1 + $0x50] sm:$0xff]
    %v36 = vld [vmem:[%s1 + $0x58] sm:$0xff]
    %v37 = vld [vmem:[%s1 + $0x60] sm:$0xff]
    %v38 = vld [vmem:[%s1 + $0x68] sm:$0xff]
    %v39 = vld [vmem:[%s1 + $0x70] sm:$0xff]
    %v40 = vld [vmem:[%s1 + $0x78] sm:$0xff]
    %v41 = vld [vmem:[%s1 + $0x80] sm:$0xff]
    %v42 = vld [vmem:[%s1 + $0x88] sm:$0xff]
    %v43 = vld [vmem:[%s1 + $0x90] sm:$0xff]
    %v44 = vld [vmem:[%s1 + $0x98] sm:$0xff]
    %v45 = vld [vmem:[%s1 + $0xa0] sm:$0xff]
    %v46 = vld [vmem:[%s1 + $0xa8] sm:$0xff]
    %v47 = vld [vmem:[%s1 + $0xb0] sm:$0xff]
    %v48 = vld [vmem:[%s1 + $0xb8] sm:$0xff]
    %v49 = vld [vmem:[%s1 + $0xc0] sm:$0xff]
    %v50 = vld [vmem:[%s1 + $0xc8] sm:$0xff]
    %v51 = vld [vmem:[%s1 + $0xd0] sm:$0xff]
    %v52 = vld [vmem:[%s1 + $0xd8] sm:$0xff]
    %v53 = vld [vmem:[%s1 + $0xe0] sm:$0xff]
    %v54 = vld [vmem:[%s1 + $0xe8] sm:$0xff]
    %v55 = vld [vmem:[%s1 + $0xf0] sm:$0xff]
    %v56 = vld [vmem:[%s1 + $0xf8] sm:$0xff]
    %v57 = vld [vmem:[%s1 + $0x100] sm:$0xff]
    %v58 = vld [vmem:[%s1 + $0x108] sm:$0xff]
    %v59 = vld [vmem:[%s1 + $0x110] sm:$0xff]
    %v60 = vld [vmem:[%s1 + $0x118] sm:$0xff]
    %v61 = vld [vmem:[%s1 + $0x120] sm:$0xff]
    %v62 = vld [vmem:[%s1 + $0x128] sm:$0xff]
    %v63 = vld [vmem:[%s1 + $0x130] sm:$0xff]
    %v64 = vld [vmem:[%s1 + $0x138] sm:$0xff]
    %v65 = vld [vmem:[%s1 + $0x140] sm:$0xff]
    %v66 = vld [vmem:[%s1 + $0x148] sm:$0xff]
    %v67 = vld [vmem:[%s1 + $0x150] sm:$0xff]
    %v68 = vld [vmem:[%s1 + $0x158] sm:$0xff]
    %v69 = vld [vmem:[%s1 + $0x160] sm:$0xff]
    %v70 = vld [vmem:[%s1 + $0x168] sm:$0xff]
    %v71 = vld [vmem:[%s1 + $0x170] sm:$0xff]
    %v72 = vld [vmem:[%s1 + $0x178] sm:$0xff]
    %v73 = vld [vmem:[%s1 + $0x180] sm:$0xff]
    %v74 = vld [vmem:[%s1 + $0x188] sm:$0xff]
    %v75 = vld [vmem:[%s1 + $0x190] sm:$0xff]
    %v76 = vld [vmem:[%s1 + $0x198] sm:$0xff]
    %v77 = vld [vmem:[%s1 + $0x1a0] sm:$0xff]
    %v78 = vld [vmem:[%s1 + $0x1a8] sm:$0xff]
    %v79 = vld [vmem:[%s1 + $0x1b0] sm:$0xff]
    %v80 = vld [vmem:[%s1 + $0x1b8] sm:$0xff]
    %v81 = vld [vmem:[%s1 + $0x1c0] sm:$0xff]
    %v82 = vld [vmem:[%s1 + $0x1c8] sm:$0xff]
    %v83 = vld [vmem:[%s1 + $0x1d0] sm:$0xff]
    %v84 = vld [vmem:[%s1 + $0x1d8] sm:$0xff]
    %v85 = vld [vmem:[%s1 + $0x1e0] sm:$0xff]
    %v86 = vld [vmem:[%s1 + $0x1e8] sm:$0xff]
    %v87 = vld [vmem:[%s1 + $0x1f0] sm:$0xff]
    %v88 = vld [vmem:[%s1 + $0x1f8] sm:$0xff]
    %v89 = vld [vmem:[%s2] sm:$0x1]
    %v91 = vlaneseq
    %v92 = vshrl.u32 %v91, 7
    %v93 = vsub.s32 0, %v92
    %v94 = vrot.slane %v89, %v93
    %96 = vmatprep.subr.mxu0 0.0
    %97 = vmatpush1.msra.mxu0 %v40
    %98 = vmatprep.subr.mxu0 0.0
    %99 = vmatpush1.msra.mxu0 %v39
    %100 = vmatprep.subr.mxu0 0.0
    %101 = vmatpush1.msra.mxu0 %v38
    %102 = vmatprep.subr.mxu0 0.0
    %103 = vmatpush1.msra.mxu0 %v37
    %104 = vmatprep.subr.mxu0 0.0
    %105 = vmatpush1.msra.mxu0 %v36
    %106 = vmatprep.subr.mxu0 0.0
    %107 = vmatpush1.msra.mxu0 %v35
    %108 = vmatprep.subr.mxu0 0.0
    %109 = vmatpush1.msra.mxu0 %v34
    %110 = vmatprep.subr.mxu0 0.0
    %111 = vmatpush1.msra.mxu0 %v33
    %112 = vmatprep.subr.mxu0 0.0
    %113 = vmatpush1.msra.mxu0 %v32
    %114 = vmatprep.subr.mxu0 0.0
    %115 = vmatpush1.msra.mxu0 %v31
    %116 = vmatprep.subr.mxu0 0.0
    %117 = vmatpush1.msra.mxu0 %v30
    %118 = vmatprep.subr.mxu0 0.0
    %119 = vmatpush1.msra.mxu0 %v29
    %120 = vmatprep.subr.mxu0 0.0
    %121 = vmatpush1.msra.mxu0 %v28
    %122 = vmatprep.subr.mxu0 0.0
    %123 = vmatpush1.msra.mxu0 %v27
    %124 = vmatprep.subr.mxu0 0.0
    %125 = vmatpush1.msra.mxu0 %v26
    %126 = vmatprep.subr.mxu0 0.0
    %127 = vmatpush1.msra.mxu0 %v25
    %128 = vmatprep.subr.mxu0 0.0
    %129 = vmatpush2.msra.mxu0 %v56
    %130 = vmatprep.subr.mxu0 0.0
    %131 = vmatpush2.msra.mxu0 %v55
    %132 = vmatprep.subr.mxu0 0.0
    %133 = vmatpush2.msra.mxu0 %v54
    %134 = vmatprep.subr.mxu0 0.0
    %135 = vmatpush2.msra.mxu0 %v53
    %136 = vmatprep.subr.mxu0 0.0
    %137 = vmatpush2.msra.mxu0 %v52
    %138 = vmatprep.subr.mxu0 0.0
    %139 = vmatpush2.msra.mxu0 %v51
    %140 = vmatprep.subr.mxu0 0.0
    %141 = vmatpush2.msra.mxu0 %v50
    %142 = vmatprep.subr.mxu0 0.0
    %143 = vmatpush2.msra.mxu0 %v49
    %144 = vmatprep.subr.mxu0 0.0
    %145 = vmatpush2.msra.mxu0 %v48
    %146 = vmatprep.subr.mxu0 0.0
    %147 = vmatpush2.msra.mxu0 %v47
    %148 = vmatprep.subr.mxu0 0.0
    %149 = vmatpush2.msra.mxu0 %v46
    %150 = vmatprep.subr.mxu0 0.0
    %151 = vmatpush2.msra.mxu0 %v45
    %152 = vmatprep.subr.mxu0 0.0
    %153 = vmatpush2.msra.mxu0 %v44
    %154 = vmatprep.subr.mxu0 0.0
    %155 = vmatpush2.msra.mxu0 %v43
    %156 = vmatprep.subr.mxu0 0.0
    %157 = vmatpush2.msra.mxu0 %v42
    %158 = vmatprep.subr.mxu0 0.0
    %159 = vmatpush2.msra.mxu0 %v41
    %160 = vmatprep.mubr.f32.mxu0 %v22
    %161 = vmatmul.mubr.f32.gmra.mxu0 %v21
    %v162 = vpop.f32.mrf.mxu0
    %v163 = vadd.f32 %v94, %v162
    %v164 = vpop.f32.mrf.mxu0
    %165 = vdwg.mxu0
    %166 = vmatprep.subr.mxu0 0.0
    %167 = vmatpush1.msra.mxu0 %v72
    %168 = vmatprep.subr.mxu0 0.0
    %169 = vmatpush1.msra.mxu0 %v71
    %170 = vmatprep.subr.mxu0 0.0
    %171 = vmatpush1.msra.mxu0 %v70
    %172 = vmatprep.subr.mxu0 0.0
    %173 = vmatpush1.msra.mxu0 %v69
    %174 = vmatprep.subr.mxu0 0.0
    %175 = vmatpush1.msra.mxu0 %v68
    %176 = vmatprep.subr.mxu0 0.0
    %177 = vmatpush1.msra.mxu0 %v67
    %178 = vmatprep.subr.mxu0 0.0
    %179 = vmatpush1.msra.mxu0 %v66
    %180 = vmatprep.subr.mxu0 0.0
    %181 = vmatpush1.msra.mxu0 %v65
    %182 = vmatprep.subr.mxu0 0.0
    %183 = vmatpush1.msra.mxu0 %v64
    %184 = vmatprep.subr.mxu0 0.0
    %185 = vmatpush1.msra.mxu0 %v63
    %186 = vmatprep.subr.mxu0 0.0
    %187 = vmatpush1.msra.mxu0 %v62
    %188 = vmatprep.subr.mxu0 0.0
    %189 = vmatpush1.msra.mxu0 %v61
    %190 = vmatprep.subr.mxu0 0.0
    %191 = vmatpush1.msra.mxu0 %v60
    %192 = vmatprep.subr.mxu0 0.0
    %193 = vmatpush1.msra.mxu0 %v59
    %194 = vmatprep.subr.mxu0 0.0
    %195 = vmatpush1.msra.mxu0 %v58
    %196 = vmatprep.subr.mxu0 0.0
    %197 = vmatpush1.msra.mxu0 %v57
    %198 = vmatprep.subr.mxu0 0.0
    %199 = vmatpush2.msra.mxu0 %v88
    %200 = vmatprep.subr.mxu0 0.0
    %201 = vmatpush2.msra.mxu0 %v87
    %202 = vmatprep.subr.mxu0 0.0
    %203 = vmatpush2.msra.mxu0 %v86
    %204 = vmatprep.subr.mxu0 0.0
    %205 = vmatpush2.msra.mxu0 %v85
    %206 = vmatprep.subr.mxu0 0.0
    %207 = vmatpush2.msra.mxu0 %v84
    %208 = vmatprep.subr.mxu0 0.0
    %209 = vmatpush2.msra.mxu0 %v83
    %210 = vmatprep.subr.mxu0 0.0
    %211 = vmatpush2.msra.mxu0 %v82
    %212 = vmatprep.subr.mxu0 0.0
    %213 = vmatpush2.msra.mxu0 %v81
    %214 = vmatprep.subr.mxu0 0.0
    %215 = vmatpush2.msra.mxu0 %v80
    %216 = vmatprep.subr.mxu0 0.0
    %217 = vmatpush2.msra.mxu0 %v79
    %218 = vmatprep.subr.mxu0 0.0
    %219 = vmatpush2.msra.mxu0 %v78
    %220 = vmatprep.subr.mxu0 0.0
    %221 = vmatpush2.msra.mxu0 %v77
    %222 = vmatprep.subr.mxu0 0.0
    %223 = vmatpush2.msra.mxu0 %v76
    %224 = vmatprep.subr.mxu0 0.0
    %225 = vmatpush2.msra.mxu0 %v75
    %226 = vmatprep.subr.mxu0 0.0
    %227 = vmatpush2.msra.mxu0 %v74
    %228 = vmatprep.subr.mxu0 0.0
    %229 = vmatpush2.msra.mxu0 %v73
    %230 = vmatprep.mubr.f32.mxu0 %v24
    %231 = vmatmul.mubr.f32.gmra.mxu0 %v23
    %v232 = vpop.f32.mrf.mxu0
    %v233 = vadd.f32 %v163, %v232
    %v234 = vpop.f32.mrf.mxu0
    %235 = vdwg.mxu0
    %vm236 = vcmask 80896
    %v237 = vsel %vm236, %v233, -inf
    %238 = vmax.xlane.f32.xlu0 %v237
    %v239 = vpop.xlane.xlu0 %238
    %v240 = vsub.f32 %v233, %v239
    %v241 = vmul.f32 %v240, 1.442695
    %v242 = vpow.pop %v241
    %v243 = vsel %vm236, %v242, 0.0
    %244 = vadd.xlane.f32.xlu0 %v243
    %v245 = vpop.xlane.xlu0 %244
    %v246 = vrcp.pop %v245
    %v247 = vmul.f32 %v242, %v246
    %248 = vst.msk [vmem:[#allocation4] sm:$0xff] %vm236, %v247
    %v249 = vld [vmem:[%s3] sm:$0xff]
    %v250 = vld [vmem:[%s3 + $0x8] sm:$0xff]
    %v251 = vld [vmem:[%s3 + $0x10] sm:$0xff]
    %v252 = vld [vmem:[%s3 + $0x18] sm:$0xff]
    %vm253 = vcmp.ge.u32.totalorder %v249, 2147483648
    %vm254 = vcmp.ge.u32.totalorder %v250, 2147483648
    %vm255 = vcmp.ge.u32.totalorder %v251, 2147483648
    %vm256 = vcmp.ge.u32.totalorder %v252, 2147483648
    %v257 = vmul.f32 %v21, 2.0
    %v258 = vmul.f32 %v22, 2.0
    %v259 = vmul.f32 %v23, 2.0
    %v260 = vmul.f32 %v24, 2.0
    %v261 = vsel %vm253, %v257, 0.0
    %v262 = vsel %vm254, %v258, 0.0
    %v263 = vsel %vm255, %v259, 0.0
    %v264 = vsel %vm256, %v260, 0.0
    %265 = vst [vmem:[#allocation2] sm:$0xff] %v261
    %266 = vst [vmem:[#allocation2 + $0x8] sm:$0xff] %v262
    %267 = vst [vmem:[#allocation2 + $0x10] sm:$0xff] %v263
    %268 = vst [vmem:[#allocation2 + $0x18] sm:$0xff] %v264
    // Predicated region
    $region18: #{tpu_custom_call.1} parent=1 // pred_check
      _
    $region19: #{tpu_custom_call.1} parent=1 // pred_check_branch
      %270 = sbr.rel (0) target = $region21
    $region20: #{tpu_custom_call.1} parent=1 // pred_region
      %s272 = ssub.s32 512, 512
      %273 = vsyncadd [#allocation3], %s272
      %s275 = sshll.u32 [#allocation2], 4
      %s276 = int_to_ptr.vmem [resolvable:$true] %s275
      %278 = dma.vmem_to_hbm [thread:$0]  %s276, 512, %s4, [#allocation3]
    $region21: #{tpu_custom_call.1} parent=1 // pred_fallthru
      _
    // Predicated region
    $region22: #{tpu_custom_call.1} parent=1 // pred_check
      _
    $region23: #{tpu_custom_call.1} parent=1 // pred_check_branch
      %280 = sbr.rel (0) target = $region25
    $region24: #{tpu_custom_call.1} parent=1 // pred_region
      %s282 = ssub.s32 128, 128
      %283 = vsyncadd [#allocation5], %s282
      %s285 = sshll.u32 [#allocation4], 4
      %s286 = int_to_ptr.vmem [resolvable:$true] %s285
      %288 = dma.vmem_to_hbm [thread:$0]  %s286, 128, %s5, [#allocation5]
    $region25: #{tpu_custom_call.1} parent=1 // pred_fallthru
      _
    // Predicated region
    $region26: #{tpu_custom_call.1} parent=1 // pred_check
      _
    $region27: #{tpu_custom_call.1} parent=1 // pred_check_branch
      %290 = sbr.rel (0) target = $region29
    $region28: #{tpu_custom_call.1} parent=1 // pred_region
      %291 = dma.done [#allocation3], 512
    $region29: #{tpu_custom_call.1} parent=1 // pred_fallthru
      _
    // Predicated region
    $region30: #{tpu_custom_call.1} parent=1 // pred_check
      _
    $region31: #{tpu_custom_call.1} parent=1 // pred_check_branch
      %293 = sbr.rel (0) target = $region33
    $region32: #{tpu_custom_call.1} parent=1 // pred_region
      %294 = dma.done [#allocation5], 128
    $region33: #{tpu_custom_call.1} parent=1 // pred_fallthru
      _
    %295 = vsyncpa [#allocation3], 1
    %296 = vsyncpa [#allocation5], 1

</llo_original>
